<compile_context>
chip_gen: v6e
topology: v6e:2x2x1
jax: 0.10.0
libtpu: 0.0.40
codegen_flags: <defaults>
</compile_context>

<pallas_src>
import jax
import jax.numpy as jnp
from jax.experimental import pallas as pl
from jax.experimental.pallas import tpu as pltpu

IN_FEATURES = 12
HIDDEN = 6


def _round_up(n, m):
    return ((n + m - 1) // m) * m


def mlp_kernel(xT_ref, w1_ref, b1_ref, w2_ref, b2_ref, o_ref):
    """One batch tile. Batch on lanes, features on sublanes (pure VPU path).

    xT_ref : VMEM (12, TB) f32  -- x transposed, batch along lanes
    w1_ref : SMEM (12, 6)  f32  -- Linear(12,6) weight stored (in, out)
    b1_ref : SMEM (6,)     f32
    w2_ref : SMEM (6,)     f32  -- Linear(6,1) weight
    b2_ref : SMEM (1,)     f32
    o_ref  : VMEM (1, TB)  f32  -- sigmoid output, batch along lanes
    """
    xT = xT_ref[...]                                   # (12, TB)
    tb = xT.shape[1]
    zeros = jnp.zeros((1, tb), jnp.float32)            # hoisted broadcast base

    z = zeros + b2_ref[0]                              # layer-2 accumulator
    for j in range(HIDDEN):                            # 6 hidden units, unrolled
        acc = zeros + b1_ref[j]
        for k in range(IN_FEATURES):                   # 12 broadcast FMAs
            acc = acc + w1_ref[k, j] * xT[k:k + 1, :]
        z = z + w2_ref[j] * jnp.maximum(acc, 0.0)      # ReLU, then layer-2 FMA
    o_ref[...] = jax.nn.sigmoid(z).astype(o_ref.dtype)


def titanic_mlp(x, w1, b1, w2, b2, *, max_tile=1024):
    """x: (B, 12) f32 -> (B, 1) f32. Matches sigmoid(relu(x@w1+b1)@w2+b2)."""
    B = x.shape[0]
    # Lane-dense batch tile: multiple of 128, capped at max_tile.
    TB = min(_round_up(max_tile, 128), _round_up(max(B, 1), 128))
    B_pad = _round_up(B, TB)

    # Transpose + zero-pad batch so it tiles evenly; padded rows are sliced off.
    xT = jnp.zeros((IN_FEATURES, B_pad), jnp.float32)
    xT = xT.at[:, :B].set(x.astype(jnp.float32).T)

    out = pl.pallas_call(
        mlp_kernel,
        out_shape=jax.ShapeDtypeStruct((1, B_pad), jnp.float32),
        grid=(B_pad // TB,),
        in_specs=[
            pl.BlockSpec((IN_FEATURES, TB), lambda i: (0, i)),      # x tile (VMEM)
            pl.BlockSpec(memory_space=pltpu.MemorySpace.SMEM),      # w1
            pl.BlockSpec(memory_space=pltpu.MemorySpace.SMEM),      # b1
            pl.BlockSpec(memory_space=pltpu.MemorySpace.SMEM),      # w2
            pl.BlockSpec(memory_space=pltpu.MemorySpace.SMEM),      # b2
        ],
        out_specs=pl.BlockSpec((1, TB), lambda i: (0, i)),          # lane-dense out
        compiler_params=pltpu.CompilerParams(
            dimension_semantics=("parallel",),                      # megacore-friendly
        ),
    )(xT, w1, b1, w2, b2)

    return out[0, :B].reshape(B, 1)


def init_params(key):
    """Deterministic init mimicking nn.Linear's U(-1/sqrt(fan_in), 1/sqrt(fan_in))."""
    k1, k2, k3, k4 = jax.random.split(key, 4)
    bound1 = 1.0 / jnp.sqrt(12.0)
    bound2 = 1.0 / jnp.sqrt(6.0)
    # Stored as (in, out) — i.e. PyTorch weight.T — so compute is x @ W.
    w1 = jax.random.uniform(k1, (12, 6), jnp.float32, -bound1, bound1)
    b1 = jax.random.uniform(k2, (6,), jnp.float32, -bound1, bound1)
    w2 = jax.random.uniform(k3, (6,), jnp.float32, -bound2, bound2)
    b2 = jax.random.uniform(k4, (1,), jnp.float32, -bound2, bound2)
    return w1, b1, w2, b2


def reference(x, w1, b1, w2, b2):
    h = jnp.maximum(x @ w1 + b1[None, :], 0.0)
    return jax.nn.sigmoid(h @ w2[:, None] + b2[None, :])


if __name__ == "__main__":
    key = jax.random.PRNGKey(0)
    kx, kx2, kp = jax.random.split(key, 3)
    w1, b1, w2, b2 = init_params(kp)

    # Small batch (pads up to one 128-lane tile).
    batch = 8
    x = jax.random.normal(kx, (batch, 12), jnp.float32)
    out = jax.block_until_ready(titanic_mlp(x, w1, b1, w2, b2))
    expected = reference(x, w1, b1, w2, b2)
    assert out.shape == (batch, 1), out.shape
    assert jnp.allclose(out, expected, atol=1e-5, rtol=1e-5)

    # Multi-tile path: batch not a multiple of the tile, several grid steps.
    batch2 = 300
    x2 = jax.random.normal(kx2, (batch2, 12), jnp.float32)
    out2 = jax.block_until_ready(titanic_mlp(x2, w1, b1, w2, b2, max_tile=128))
    expected2 = reference(x2, w1, b1, w2, b2)
    assert out2.shape == (batch2, 1), out2.shape
    assert jnp.allclose(out2, expected2, atol=1e-5, rtol=1e-5)

    print("KERNEL_OK")
</pallas_src>

<mosaic_0001>
module attributes {stable_mosaic.version = 11 : i64} {
  func.func @mlp_kernel(%arg0: i32, %arg1: memref<12x128xf32, #tpu.memory_space<vmem>>, %arg2: memref<12x6xf32, #tpu.memory_space<smem>>, %arg3: memref<6xf32, #tpu.memory_space<smem>>, %arg4: memref<6xf32, #tpu.memory_space<smem>>, %arg5: memref<1xf32, #tpu.memory_space<smem>>, %arg6: memref<1x128xf32, #tpu.memory_space<vmem>>) attributes {dimension_semantics = [#tpu.dimension_semantics<parallel>], iteration_bounds = array<i64: 1>, scalar_prefetch = 0 : i64, scratch_operands = 0 : i64, tpu.core_type = #tpu.core_type<tc>, window_params = [{transform_indices = @transform_0, window_bounds = array<i64: 12, 128>}, {transform_indices = @transform_1, window_bounds = array<i64: 12, 6>}, {transform_indices = @transform_2, window_bounds = array<i64: 6>}, {transform_indices = @transform_3, window_bounds = array<i64: 6>}, {transform_indices = @transform_4, window_bounds = array<i64: 1>}, {transform_indices = @transform_5, window_bounds = array<i64: 1, 128>}]} {
    %c0 = arith.constant 0 : index
    %c0_0 = arith.constant 0 : index
    %0 = vector.load %arg1[%c0, %c0_0] : memref<12x128xf32, #tpu.memory_space<vmem>>, vector<12x128xf32>
    %cst = arith.constant 0.000000e+00 : f32
    %1 = vector.broadcast %cst : f32 to vector<1x128xf32>
    %c0_1 = arith.constant 0 : index
    %2 = memref.load %arg5[%c0_1] : memref<1xf32, #tpu.memory_space<smem>>
    %3 = vector.broadcast %2 : f32 to vector<1x128xf32>
    %4 = arith.addf %1, %3 : vector<1x128xf32>
    %c0_2 = arith.constant 0 : index
    %5 = memref.load %arg3[%c0_2] : memref<6xf32, #tpu.memory_space<smem>>
    %6 = vector.broadcast %5 : f32 to vector<1x128xf32>
    %7 = arith.addf %1, %6 : vector<1x128xf32>
    %c0_3 = arith.constant 0 : index
    %c0_4 = arith.constant 0 : index
    %8 = memref.load %arg2[%c0_3, %c0_4] : memref<12x6xf32, #tpu.memory_space<smem>>
    %9 = vector.extract_strided_slice %0 {offsets = [0, 0], sizes = [1, 128], strides = [1, 1]} : vector<12x128xf32> to vector<1x128xf32>
    %10 = vector.broadcast %8 : f32 to vector<1x128xf32>
    %11 = arith.mulf %10, %9 : vector<1x128xf32>
    %12 = arith.addf %7, %11 : vector<1x128xf32>
    %c1 = arith.constant 1 : index
    %c0_5 = arith.constant 0 : index
    %13 = memref.load %arg2[%c1, %c0_5] : memref<12x6xf32, #tpu.memory_space<smem>>
    %14 = vector.extract_strided_slice %0 {offsets = [1, 0], sizes = [1, 128], strides = [1, 1]} : vector<12x128xf32> to vector<1x128xf32>
    %15 = vector.broadcast %13 : f32 to vector<1x128xf32>
    %16 = arith.mulf %15, %14 : vector<1x128xf32>
    %17 = arith.addf %12, %16 : vector<1x128xf32>
    %c2 = arith.constant 2 : index
    %c0_6 = arith.constant 0 : index
    %18 = memref.load %arg2[%c2, %c0_6] : memref<12x6xf32, #tpu.memory_space<smem>>
    %19 = vector.extract_strided_slice %0 {offsets = [2, 0], sizes = [1, 128], strides = [1, 1]} : vector<12x128xf32> to vector<1x128xf32>
    %20 = vector.broadcast %18 : f32 to vector<1x128xf32>
    %21 = arith.mulf %20, %19 : vector<1x128xf32>
    %22 = arith.addf %17, %21 : vector<1x128xf32>
    %c3 = arith.constant 3 : index
    %c0_7 = arith.constant 0 : index
    %23 = memref.load %arg2[%c3, %c0_7] : memref<12x6xf32, #tpu.memory_space<smem>>
    %24 = vector.extract_strided_slice %0 {offsets = [3, 0], sizes = [1, 128], strides = [1, 1]} : vector<12x128xf32> to vector<1x128xf32>
    %25 = vector.broadcast %23 : f32 to vector<1x128xf32>
    %26 = arith.mulf %25, %24 : vector<1x128xf32>
    %27 = arith.addf %22, %26 : vector<1x128xf32>
    %c4 = arith.constant 4 : index
    %c0_8 = arith.constant 0 : index
    %28 = memref.load %arg2[%c4, %c0_8] : memref<12x6xf32, #tpu.memory_space<smem>>
    %29 = vector.extract_strided_slice %0 {offsets = [4, 0], sizes = [1, 128], strides = [1, 1]} : vector<12x128xf32> to vector<1x128xf32>
    %30 = vector.broadcast %28 : f32 to vector<1x128xf32>
    %31 = arith.mulf %30, %29 : vector<1x128xf32>
    %32 = arith.addf %27, %31 : vector<1x128xf32>
    %c5 = arith.constant 5 : index
    %c0_9 = arith.constant 0 : index
    %33 = memref.load %arg2[%c5, %c0_9] : memref<12x6xf32, #tpu.memory_space<smem>>
    %34 = vector.extract_strided_slice %0 {offsets = [5, 0], sizes = [1, 128], strides = [1, 1]} : vector<12x128xf32> to vector<1x128xf32>
    %35 = vector.broadcast %33 : f32 to vector<1x128xf32>
    %36 = arith.mulf %35, %34 : vector<1x128xf32>
    %37 = arith.addf %32, %36 : vector<1x128xf32>
    %c6 = arith.constant 6 : index
    %c0_10 = arith.constant 0 : index
    %38 = memref.load %arg2[%c6, %c0_10] : memref<12x6xf32, #tpu.memory_space<smem>>
    %39 = vector.extract_strided_slice %0 {offsets = [6, 0], sizes = [1, 128], strides = [1, 1]} : vector<12x128xf32> to vector<1x128xf32>
    %40 = vector.broadcast %38 : f32 to vector<1x128xf32>
    %41 = arith.mulf %40, %39 : vector<1x128xf32>
    %42 = arith.addf %37, %41 : vector<1x128xf32>
    %c7 = arith.constant 7 : index
    %c0_11 = arith.constant 0 : index
    %43 = memref.load %arg2[%c7, %c0_11] : memref<12x6xf32, #tpu.memory_space<smem>>
    %44 = vector.extract_strided_slice %0 {offsets = [7, 0], sizes = [1, 128], strides = [1, 1]} : vector<12x128xf32> to vector<1x128xf32>
    %45 = vector.broadcast %43 : f32 to vector<1x128xf32>
    %46 = arith.mulf %45, %44 : vector<1x128xf32>
    %47 = arith.addf %42, %46 : vector<1x128xf32>
    %c8 = arith.constant 8 : index
    %c0_12 = arith.constant 0 : index
    %48 = memref.load %arg2[%c8, %c0_12] : memref<12x6xf32, #tpu.memory_space<smem>>
    %49 = vector.extract_strided_slice %0 {offsets = [8, 0], sizes = [1, 128], strides = [1, 1]} : vector<12x128xf32> to vector<1x128xf32>
    %50 = vector.broadcast %48 : f32 to vector<1x128xf32>
    %51 = arith.mulf %50, %49 : vector<1x128xf32>
    %52 = arith.addf %47, %51 : vector<1x128xf32>
    %c9 = arith.constant 9 : index
    %c0_13 = arith.constant 0 : index
    %53 = memref.load %arg2[%c9, %c0_13] : memref<12x6xf32, #tpu.memory_space<smem>>
    %54 = vector.extract_strided_slice %0 {offsets = [9, 0], sizes = [1, 128], strides = [1, 1]} : vector<12x128xf32> to vector<1x128xf32>
    %55 = vector.broadcast %53 : f32 to vector<1x128xf32>
    %56 = arith.mulf %55, %54 : vector<1x128xf32>
    %57 = arith.addf %52, %56 : vector<1x128xf32>
    %c10 = arith.constant 10 : index
    %c0_14 = arith.constant 0 : index
    %58 = memref.load %arg2[%c10, %c0_14] : memref<12x6xf32, #tpu.memory_space<smem>>
    %59 = vector.extract_strided_slice %0 {offsets = [10, 0], sizes = [1, 128], strides = [1, 1]} : vector<12x128xf32> to vector<1x128xf32>
    %60 = vector.broadcast %58 : f32 to vector<1x128xf32>
    %61 = arith.mulf %60, %59 : vector<1x128xf32>
    %62 = arith.addf %57, %61 : vector<1x128xf32>
    %c11 = arith.constant 11 : index
    %c0_15 = arith.constant 0 : index
    %63 = memref.load %arg2[%c11, %c0_15] : memref<12x6xf32, #tpu.memory_space<smem>>
    %64 = vector.extract_strided_slice %0 {offsets = [11, 0], sizes = [1, 128], strides = [1, 1]} : vector<12x128xf32> to vector<1x128xf32>
    %65 = vector.broadcast %63 : f32 to vector<1x128xf32>
    %66 = arith.mulf %65, %64 : vector<1x128xf32>
    %67 = arith.addf %62, %66 : vector<1x128xf32>
    %c0_16 = arith.constant 0 : index
    %68 = memref.load %arg4[%c0_16] : memref<6xf32, #tpu.memory_space<smem>>
    %cst_17 = arith.constant 0.000000e+00 : f32
    %69 = vector.broadcast %cst_17 : f32 to vector<1x128xf32>
    %70 = arith.maximumf %67, %69 : vector<1x128xf32>
    %71 = vector.broadcast %68 : f32 to vector<1x128xf32>
    %72 = arith.mulf %71, %70 : vector<1x128xf32>
    %73 = arith.addf %4, %72 : vector<1x128xf32>
    %c1_18 = arith.constant 1 : index
    %74 = memref.load %arg3[%c1_18] : memref<6xf32, #tpu.memory_space<smem>>
    %75 = vector.broadcast %74 : f32 to vector<1x128xf32>
    %76 = arith.addf %1, %75 : vector<1x128xf32>
    %c0_19 = arith.constant 0 : index
    %c1_20 = arith.constant 1 : index
    %77 = memref.load %arg2[%c0_19, %c1_20] : memref<12x6xf32, #tpu.memory_space<smem>>
    %78 = vector.extract_strided_slice %0 {offsets = [0, 0], sizes = [1, 128], strides = [1, 1]} : vector<12x128xf32> to vector<1x128xf32>
    %79 = vector.broadcast %77 : f32 to vector<1x128xf32>
    %80 = arith.mulf %79, %78 : vector<1x128xf32>
    %81 = arith.addf %76, %80 : vector<1x128xf32>
    %c1_21 = arith.constant 1 : index
    %c1_22 = arith.constant 1 : index
    %82 = memref.load %arg2[%c1_21, %c1_22] : memref<12x6xf32, #tpu.memory_space<smem>>
    %83 = vector.extract_strided_slice %0 {offsets = [1, 0], sizes = [1, 128], strides = [1, 1]} : vector<12x128xf32> to vector<1x128xf32>
    %84 = vector.broadcast %82 : f32 to vector<1x128xf32>
    %85 = arith.mulf %84, %83 : vector<1x128xf32>
    %86 = arith.addf %81, %85 : vector<1x128xf32>
    %c2_23 = arith.constant 2 : index
    %c1_24 = arith.constant 1 : index
    %87 = memref.load %arg2[%c2_23, %c1_24] : memref<12x6xf32, #tpu.memory_space<smem>>
    %88 = vector.extract_strided_slice %0 {offsets = [2, 0], sizes = [1, 128], strides = [1, 1]} : vector<12x128xf32> to vector<1x128xf32>
    %89 = vector.broadcast %87 : f32 to vector<1x128xf32>
    %90 = arith.mulf %89, %88 : vector<1x128xf32>
    %91 = arith.addf %86, %90 : vector<1x128xf32>
    %c3_25 = arith.constant 3 : index
    %c1_26 = arith.constant 1 : index
    %92 = memref.load %arg2[%c3_25, %c1_26] : memref<12x6xf32, #tpu.memory_space<smem>>
    %93 = vector.extract_strided_slice %0 {offsets = [3, 0], sizes = [1, 128], strides = [1, 1]} : vector<12x128xf32> to vector<1x128xf32>
    %94 = vector.broadcast %92 : f32 to vector<1x128xf32>
    %95 = arith.mulf %94, %93 : vector<1x128xf32>
    %96 = arith.addf %91, %95 : vector<1x128xf32>
    %c4_27 = arith.constant 4 : index
    %c1_28 = arith.constant 1 : index
    %97 = memref.load %arg2[%c4_27, %c1_28] : memref<12x6xf32, #tpu.memory_space<smem>>
    %98 = vector.extract_strided_slice %0 {offsets = [4, 0], sizes = [1, 128], strides = [1, 1]} : vector<12x128xf32> to vector<1x128xf32>
    %99 = vector.broadcast %97 : f32 to vector<1x128xf32>
    %100 = arith.mulf %99, %98 : vector<1x128xf32>
    %101 = arith.addf %96, %100 : vector<1x128xf32>
    %c5_29 = arith.constant 5 : index
    %c1_30 = arith.constant 1 : index
    %102 = memref.load %arg2[%c5_29, %c1_30] : memref<12x6xf32, #tpu.memory_space<smem>>
    %103 = vector.extract_strided_slice %0 {offsets = [5, 0], sizes = [1, 128], strides = [1, 1]} : vector<12x128xf32> to vector<1x128xf32>
    %104 = vector.broadcast %102 : f32 to vector<1x128xf32>
    %105 = arith.mulf %104, %103 : vector<1x128xf32>
    %106 = arith.addf %101, %105 : vector<1x128xf32>
    %c6_31 = arith.constant 6 : index
    %c1_32 = arith.constant 1 : index
    %107 = memref.load %arg2[%c6_31, %c1_32] : memref<12x6xf32, #tpu.memory_space<smem>>
    %108 = vector.extract_strided_slice %0 {offsets = [6, 0], sizes = [1, 128], strides = [1, 1]} : vector<12x128xf32> to vector<1x128xf32>
    %109 = vector.broadcast %107 : f32 to vector<1x128xf32>
    %110 = arith.mulf %109, %108 : vector<1x128xf32>
    %111 = arith.addf %106, %110 : vector<1x128xf32>
    %c7_33 = arith.constant 7 : index
    %c1_34 = arith.constant 1 : index
    %112 = memref.load %arg2[%c7_33, %c1_34] : memref<12x6xf32, #tpu.memory_space<smem>>
    %113 = vector.extract_strided_slice %0 {offsets = [7, 0], sizes = [1, 128], strides = [1, 1]} : vector<12x128xf32> to vector<1x128xf32>
    %114 = vector.broadcast %112 : f32 to vector<1x128xf32>
    %115 = arith.mulf %114, %113 : vector<1x128xf32>
    %116 = arith.addf %111, %115 : vector<1x128xf32>
    %c8_35 = arith.constant 8 : index
    %c1_36 = arith.constant 1 : index
    %117 = memref.load %arg2[%c8_35, %c1_36] : memref<12x6xf32, #tpu.memory_space<smem>>
    %118 = vector.extract_strided_slice %0 {offsets = [8, 0], sizes = [1, 128], strides = [1, 1]} : vector<12x128xf32> to vector<1x128xf32>
    %119 = vector.broadcast %117 : f32 to vector<1x128xf32>
    %120 = arith.mulf %119, %118 : vector<1x128xf32>
    %121 = arith.addf %116, %120 : vector<1x128xf32>
    %c9_37 = arith.constant 9 : index
    %c1_38 = arith.constant 1 : index
    %122 = memref.load %arg2[%c9_37, %c1_38] : memref<12x6xf32, #tpu.memory_space<smem>>
    %123 = vector.extract_strided_slice %0 {offsets = [9, 0], sizes = [1, 128], strides = [1, 1]} : vector<12x128xf32> to vector<1x128xf32>
    %124 = vector.broadcast %122 : f32 to vector<1x128xf32>
    %125 = arith.mulf %124, %123 : vector<1x128xf32>
    %126 = arith.addf %121, %125 : vector<1x128xf32>
    %c10_39 = arith.constant 10 : index
    %c1_40 = arith.constant 1 : index
    %127 = memref.load %arg2[%c10_39, %c1_40] : memref<12x6xf32, #tpu.memory_space<smem>>
    %128 = vector.extract_strided_slice %0 {offsets = [10, 0], sizes = [1, 128], strides = [1, 1]} : vector<12x128xf32> to vector<1x128xf32>
    %129 = vector.broadcast %127 : f32 to vector<1x128xf32>
    %130 = arith.mulf %129, %128 : vector<1x128xf32>
    %131 = arith.addf %126, %130 : vector<1x128xf32>
    %c11_41 = arith.constant 11 : index
    %c1_42 = arith.constant 1 : index
    %132 = memref.load %arg2[%c11_41, %c1_42] : memref<12x6xf32, #tpu.memory_space<smem>>
    %133 = vector.extract_strided_slice %0 {offsets = [11, 0], sizes = [1, 128], strides = [1, 1]} : vector<12x128xf32> to vector<1x128xf32>
    %134 = vector.broadcast %132 : f32 to vector<1x128xf32>
    %135 = arith.mulf %134, %133 : vector<1x128xf32>
    %136 = arith.addf %131, %135 : vector<1x128xf32>
    %c1_43 = arith.constant 1 : index
    %137 = memref.load %arg4[%c1_43] : memref<6xf32, #tpu.memory_space<smem>>
    %cst_44 = arith.constant 0.000000e+00 : f32
    %138 = vector.broadcast %cst_44 : f32 to vector<1x128xf32>
    %139 = arith.maximumf %136, %138 : vector<1x128xf32>
    %140 = vector.broadcast %137 : f32 to vector<1x128xf32>
    %141 = arith.mulf %140, %139 : vector<1x128xf32>
    %142 = arith.addf %73, %141 : vector<1x128xf32>
    %c2_45 = arith.constant 2 : index
    %143 = memref.load %arg3[%c2_45] : memref<6xf32, #tpu.memory_space<smem>>
    %144 = vector.broadcast %143 : f32 to vector<1x128xf32>
    %145 = arith.addf %1, %144 : vector<1x128xf32>
    %c0_46 = arith.constant 0 : index
    %c2_47 = arith.constant 2 : index
    %146 = memref.load %arg2[%c0_46, %c2_47] : memref<12x6xf32, #tpu.memory_space<smem>>
    %147 = vector.extract_strided_slice %0 {offsets = [0, 0], sizes = [1, 128], strides = [1, 1]} : vector<12x128xf32> to vector<1x128xf32>
    %148 = vector.broadcast %146 : f32 to vector<1x128xf32>
    %149 = arith.mulf %148, %147 : vector<1x128xf32>
    %150 = arith.addf %145, %149 : vector<1x128xf32>
    %c1_48 = arith.constant 1 : index
    %c2_49 = arith.constant 2 : index
    %151 = memref.load %arg2[%c1_48, %c2_49] : memref<12x6xf32, #tpu.memory_space<smem>>
    %152 = vector.extract_strided_slice %0 {offsets = [1, 0], sizes = [1, 128], strides = [1, 1]} : vector<12x128xf32> to vector<1x128xf32>
    %153 = vector.broadcast %151 : f32 to vector<1x128xf32>
    %154 = arith.mulf %153, %152 : vector<1x128xf32>
    %155 = arith.addf %150, %154 : vector<1x128xf32>
    %c2_50 = arith.constant 2 : index
    %c2_51 = arith.constant 2 : index
    %156 = memref.load %arg2[%c2_50, %c2_51] : memref<12x6xf32, #tpu.memory_space<smem>>
    %157 = vector.extract_strided_slice %0 {offsets = [2, 0], sizes = [1, 128], strides = [1, 1]} : vector<12x128xf32> to vector<1x128xf32>
    %158 = vector.broadcast %156 : f32 to vector<1x128xf32>
    %159 = arith.mulf %158, %157 : vector<1x128xf32>
    %160 = arith.addf %155, %159 : vector<1x128xf32>
    %c3_52 = arith.constant 3 : index
    %c2_53 = arith.constant 2 : index
    %161 = memref.load %arg2[%c3_52, %c2_53] : memref<12x6xf32, #tpu.memory_space<smem>>
    %162 = vector.extract_strided_slice %0 {offsets = [3, 0], sizes = [1, 128], strides = [1, 1]} : vector<12x128xf32> to vector<1x128xf32>
    %163 = vector.broadcast %161 : f32 to vector<1x128xf32>
    %164 = arith.mulf %163, %162 : vector<1x128xf32>
    %165 = arith.addf %160, %164 : vector<1x128xf32>
    %c4_54 = arith.constant 4 : index
    %c2_55 = arith.constant 2 : index
    %166 = memref.load %arg2[%c4_54, %c2_55] : memref<12x6xf32, #tpu.memory_space<smem>>
    %167 = vector.extract_strided_slice %0 {offsets = [4, 0], sizes = [1, 128], strides = [1, 1]} : vector<12x128xf32> to vector<1x128xf32>
    %168 = vector.broadcast %166 : f32 to vector<1x128xf32>
    %169 = arith.mulf %168, %167 : vector<1x128xf32>
    %170 = arith.addf %165, %169 : vector<1x128xf32>
    %c5_56 = arith.constant 5 : index
    %c2_57 = arith.constant 2 : index
    %171 = memref.load %arg2[%c5_56, %c2_57] : memref<12x6xf32, #tpu.memory_space<smem>>
    %172 = vector.extract_strided_slice %0 {offsets = [5, 0], sizes = [1, 128], strides = [1, 1]} : vector<12x128xf32> to vector<1x128xf32>
    %173 = vector.broadcast %171 : f32 to vector<1x128xf32>
    %174 = arith.mulf %173, %172 : vector<1x128xf32>
    %175 = arith.addf %170, %174 : vector<1x128xf32>
    %c6_58 = arith.constant 6 : index
    %c2_59 = arith.constant 2 : index
    %176 = memref.load %arg2[%c6_58, %c2_59] : memref<12x6xf32, #tpu.memory_space<smem>>
    %177 = vector.extract_strided_slice %0 {offsets = [6, 0], sizes = [1, 128], strides = [1, 1]} : vector<12x128xf32> to vector<1x128xf32>
    %178 = vector.broadcast %176 : f32 to vector<1x128xf32>
    %179 = arith.mulf %178, %177 : vector<1x128xf32>
    %180 = arith.addf %175, %179 : vector<1x128xf32>
    %c7_60 = arith.constant 7 : index
    %c2_61 = arith.constant 2 : index
    %181 = memref.load %arg2[%c7_60, %c2_61] : memref<12x6xf32, #tpu.memory_space<smem>>
    %182 = vector.extract_strided_slice %0 {offsets = [7, 0], sizes = [1, 128], strides = [1, 1]} : vector<12x128xf32> to vector<1x128xf32>
    %183 = vector.broadcast %181 : f32 to vector<1x128xf32>
    %184 = arith.mulf %183, %182 : vector<1x128xf32>
    %185 = arith.addf %180, %184 : vector<1x128xf32>
    %c8_62 = arith.constant 8 : index
    %c2_63 = arith.constant 2 : index
    %186 = memref.load %arg2[%c8_62, %c2_63] : memref<12x6xf32, #tpu.memory_space<smem>>
    %187 = vector.extract_strided_slice %0 {offsets = [8, 0], sizes = [1, 128], strides = [1, 1]} : vector<12x128xf32> to vector<1x128xf32>
    %188 = vector.broadcast %186 : f32 to vector<1x128xf32>
    %189 = arith.mulf %188, %187 : vector<1x128xf32>
    %190 = arith.addf %185, %189 : vector<1x128xf32>
    %c9_64 = arith.constant 9 : index
    %c2_65 = arith.constant 2 : index
    %191 = memref.load %arg2[%c9_64, %c2_65] : memref<12x6xf32, #tpu.memory_space<smem>>
    %192 = vector.extract_strided_slice %0 {offsets = [9, 0], sizes = [1, 128], strides = [1, 1]} : vector<12x128xf32> to vector<1x128xf32>
    %193 = vector.broadcast %191 : f32 to vector<1x128xf32>
    %194 = arith.mulf %193, %192 : vector<1x128xf32>
    %195 = arith.addf %190, %194 : vector<1x128xf32>
    %c10_66 = arith.constant 10 : index
    %c2_67 = arith.constant 2 : index
    %196 = memref.load %arg2[%c10_66, %c2_67] : memref<12x6xf32, #tpu.memory_space<smem>>
    %197 = vector.extract_strided_slice %0 {offsets = [10, 0], sizes = [1, 128], strides = [1, 1]} : vector<12x128xf32> to vector<1x128xf32>
    %198 = vector.broadcast %196 : f32 to vector<1x128xf32>
    %199 = arith.mulf %198, %197 : vector<1x128xf32>
    %200 = arith.addf %195, %199 : vector<1x128xf32>
    %c11_68 = arith.constant 11 : index
    %c2_69 = arith.constant 2 : index
    %201 = memref.load %arg2[%c11_68, %c2_69] : memref<12x6xf32, #tpu.memory_space<smem>>
    %202 = vector.extract_strided_slice %0 {offsets = [11, 0], sizes = [1, 128], strides = [1, 1]} : vector<12x128xf32> to vector<1x128xf32>
    %203 = vector.broadcast %201 : f32 to vector<1x128xf32>
    %204 = arith.mulf %203, %202 : vector<1x128xf32>
    %205 = arith.addf %200, %204 : vector<1x128xf32>
    %c2_70 = arith.constant 2 : index
    %206 = memref.load %arg4[%c2_70] : memref<6xf32, #tpu.memory_space<smem>>
    %cst_71 = arith.constant 0.000000e+00 : f32
    %207 = vector.broadcast %cst_71 : f32 to vector<1x128xf32>
    %208 = arith.maximumf %205, %207 : vector<1x128xf32>
    %209 = vector.broadcast %206 : f32 to vector<1x128xf32>
    %210 = arith.mulf %209, %208 : vector<1x128xf32>
    %211 = arith.addf %142, %210 : vector<1x128xf32>
    %c3_72 = arith.constant 3 : index
    %212 = memref.load %arg3[%c3_72] : memref<6xf32, #tpu.memory_space<smem>>
    %213 = vector.broadcast %212 : f32 to vector<1x128xf32>
    %214 = arith.addf %1, %213 : vector<1x128xf32>
    %c0_73 = arith.constant 0 : index
    %c3_74 = arith.constant 3 : index
    %215 = memref.load %arg2[%c0_73, %c3_74] : memref<12x6xf32, #tpu.memory_space<smem>>
    %216 = vector.extract_strided_slice %0 {offsets = [0, 0], sizes = [1, 128], strides = [1, 1]} : vector<12x128xf32> to vector<1x128xf32>
    %217 = vector.broadcast %215 : f32 to vector<1x128xf32>
    %218 = arith.mulf %217, %216 : vector<1x128xf32>
    %219 = arith.addf %214, %218 : vector<1x128xf32>
    %c1_75 = arith.constant 1 : index
    %c3_76 = arith.constant 3 : index
    %220 = memref.load %arg2[%c1_75, %c3_76] : memref<12x6xf32, #tpu.memory_space<smem>>
    %221 = vector.extract_strided_slice %0 {offsets = [1, 0], sizes = [1, 128], strides = [1, 1]} : vector<12x128xf32> to vector<1x128xf32>
    %222 = vector.broadcast %220 : f32 to vector<1x128xf32>
    %223 = arith.mulf %222, %221 : vector<1x128xf32>
    %224 = arith.addf %219, %223 : vector<1x128xf32>
    %c2_77 = arith.constant 2 : index
    %c3_78 = arith.constant 3 : index
    %225 = memref.load %arg2[%c2_77, %c3_78] : memref<12x6xf32, #tpu.memory_space<smem>>
    %226 = vector.extract_strided_slice %0 {offsets = [2, 0], sizes = [1, 128], strides = [1, 1]} : vector<12x128xf32> to vector<1x128xf32>
    %227 = vector.broadcast %225 : f32 to vector<1x128xf32>
    %228 = arith.mulf %227, %226 : vector<1x128xf32>
    %229 = arith.addf %224, %228 : vector<1x128xf32>
    %c3_79 = arith.constant 3 : index
    %c3_80 = arith.constant 3 : index
    %230 = memref.load %arg2[%c3_79, %c3_80] : memref<12x6xf32, #tpu.memory_space<smem>>
    %231 = vector.extract_strided_slice %0 {offsets = [3, 0], sizes = [1, 128], strides = [1, 1]} : vector<12x128xf32> to vector<1x128xf32>
    %232 = vector.broadcast %230 : f32 to vector<1x128xf32>
    %233 = arith.mulf %232, %231 : vector<1x128xf32>
    %234 = arith.addf %229, %233 : vector<1x128xf32>
    %c4_81 = arith.constant 4 : index
    %c3_82 = arith.constant 3 : index
    %235 = memref.load %arg2[%c4_81, %c3_82] : memref<12x6xf32, #tpu.memory_space<smem>>
    %236 = vector.extract_strided_slice %0 {offsets = [4, 0], sizes = [1, 128], strides = [1, 1]} : vector<12x128xf32> to vector<1x128xf32>
    %237 = vector.broadcast %235 : f32 to vector<1x128xf32>
    %238 = arith.mulf %237, %236 : vector<1x128xf32>
    %239 = arith.addf %234, %238 : vector<1x128xf32>
    %c5_83 = arith.constant 5 : index
    %c3_84 = arith.constant 3 : index
    %240 = memref.load %arg2[%c5_83, %c3_84] : memref<12x6xf32, #tpu.memory_space<smem>>
    %241 = vector.extract_strided_slice %0 {offsets = [5, 0], sizes = [1, 128], strides = [1, 1]} : vector<12x128xf32> to vector<1x128xf32>
    %242 = vector.broadcast %240 : f32 to vector<1x128xf32>
    %243 = arith.mulf %242, %241 : vector<1x128xf32>
    %244 = arith.addf %239, %243 : vector<1x128xf32>
    %c6_85 = arith.constant 6 : index
    %c3_86 = arith.constant 3 : index
    %245 = memref.load %arg2[%c6_85, %c3_86] : memref<12x6xf32, #tpu.memory_space<smem>>
    %246 = vector.extract_strided_slice %0 {offsets = [6, 0], sizes = [1, 128], strides = [1, 1]} : vector<12x128xf32> to vector<1x128xf32>
    %247 = vector.broadcast %245 : f32 to vector<1x128xf32>
    %248 = arith.mulf %247, %246 : vector<1x128xf32>
    %249 = arith.addf %244, %248 : vector<1x128xf32>
    %c7_87 = arith.constant 7 : index
    %c3_88 = arith.constant 3 : index
    %250 = memref.load %arg2[%c7_87, %c3_88] : memref<12x6xf32, #tpu.memory_space<smem>>
    %251 = vector.extract_strided_slice %0 {offsets = [7, 0], sizes = [1, 128], strides = [1, 1]} : vector<12x128xf32> to vector<1x128xf32>
    %252 = vector.broadcast %250 : f32 to vector<1x128xf32>
    %253 = arith.mulf %252, %251 : vector<1x128xf32>
    %254 = arith.addf %249, %253 : vector<1x128xf32>
    %c8_89 = arith.constant 8 : index
    %c3_90 = arith.constant 3 : index
    %255 = memref.load %arg2[%c8_89, %c3_90] : memref<12x6xf32, #tpu.memory_space<smem>>
    %256 = vector.extract_strided_slice %0 {offsets = [8, 0], sizes = [1, 128], strides = [1, 1]} : vector<12x128xf32> to vector<1x128xf32>
    %257 = vector.broadcast %255 : f32 to vector<1x128xf32>
    %258 = arith.mulf %257, %256 : vector<1x128xf32>
    %259 = arith.addf %254, %258 : vector<1x128xf32>
    %c9_91 = arith.constant 9 : index
    %c3_92 = arith.constant 3 : index
    %260 = memref.load %arg2[%c9_91, %c3_92] : memref<12x6xf32, #tpu.memory_space<smem>>
    %261 = vector.extract_strided_slice %0 {offsets = [9, 0], sizes = [1, 128], strides = [1, 1]} : vector<12x128xf32> to vector<1x128xf32>
    %262 = vector.broadcast %260 : f32 to vector<1x128xf32>
    %263 = arith.mulf %262, %261 : vector<1x128xf32>
    %264 = arith.addf %259, %263 : vector<1x128xf32>
    %c10_93 = arith.constant 10 : index
    %c3_94 = arith.constant 3 : index
    %265 = memref.load %arg2[%c10_93, %c3_94] : memref<12x6xf32, #tpu.memory_space<smem>>
    %266 = vector.extract_strided_slice %0 {offsets = [10, 0], sizes = [1, 128], strides = [1, 1]} : vector<12x128xf32> to vector<1x128xf32>
    %267 = vector.broadcast %265 : f32 to vector<1x128xf32>
    %268 = arith.mulf %267, %266 : vector<1x128xf32>
    %269 = arith.addf %264, %268 : vector<1x128xf32>
    %c11_95 = arith.constant 11 : index
    %c3_96 = arith.constant 3 : index
    %270 = memref.load %arg2[%c11_95, %c3_96] : memref<12x6xf32, #tpu.memory_space<smem>>
    %271 = vector.extract_strided_slice %0 {offsets = [11, 0], sizes = [1, 128], strides = [1, 1]} : vector<12x128xf32> to vector<1x128xf32>
    %272 = vector.broadcast %270 : f32 to vector<1x128xf32>
    %273 = arith.mulf %272, %271 : vector<1x128xf32>
    %274 = arith.addf %269, %273 : vector<1x128xf32>
    %c3_97 = arith.constant 3 : index
    %275 = memref.load %arg4[%c3_97] : memref<6xf32, #tpu.memory_space<smem>>
    %cst_98 = arith.constant 0.000000e+00 : f32
    %276 = vector.broadcast %cst_98 : f32 to vector<1x128xf32>
    %277 = arith.maximumf %274, %276 : vector<1x128xf32>
    %278 = vector.broadcast %275 : f32 to vector<1x128xf32>
    %279 = arith.mulf %278, %277 : vector<1x128xf32>
    %280 = arith.addf %211, %279 : vector<1x128xf32>
    %c4_99 = arith.constant 4 : index
    %281 = memref.load %arg3[%c4_99] : memref<6xf32, #tpu.memory_space<smem>>
    %282 = vector.broadcast %281 : f32 to vector<1x128xf32>
    %283 = arith.addf %1, %282 : vector<1x128xf32>
    %c0_100 = arith.constant 0 : index
    %c4_101 = arith.constant 4 : index
    %284 = memref.load %arg2[%c0_100, %c4_101] : memref<12x6xf32, #tpu.memory_space<smem>>
    %285 = vector.extract_strided_slice %0 {offsets = [0, 0], sizes = [1, 128], strides = [1, 1]} : vector<12x128xf32> to vector<1x128xf32>
    %286 = vector.broadcast %284 : f32 to vector<1x128xf32>
    %287 = arith.mulf %286, %285 : vector<1x128xf32>
    %288 = arith.addf %283, %287 : vector<1x128xf32>
    %c1_102 = arith.constant 1 : index
    %c4_103 = arith.constant 4 : index
    %289 = memref.load %arg2[%c1_102, %c4_103] : memref<12x6xf32, #tpu.memory_space<smem>>
    %290 = vector.extract_strided_slice %0 {offsets = [1, 0], sizes = [1, 128], strides = [1, 1]} : vector<12x128xf32> to vector<1x128xf32>
    %291 = vector.broadcast %289 : f32 to vector<1x128xf32>
    %292 = arith.mulf %291, %290 : vector<1x128xf32>
    %293 = arith.addf %288, %292 : vector<1x128xf32>
    %c2_104 = arith.constant 2 : index
    %c4_105 = arith.constant 4 : index
    %294 = memref.load %arg2[%c2_104, %c4_105] : memref<12x6xf32, #tpu.memory_space<smem>>
    %295 = vector.extract_strided_slice %0 {offsets = [2, 0], sizes = [1, 128], strides = [1, 1]} : vector<12x128xf32> to vector<1x128xf32>
    %296 = vector.broadcast %294 : f32 to vector<1x128xf32>
    %297 = arith.mulf %296, %295 : vector<1x128xf32>
    %298 = arith.addf %293, %297 : vector<1x128xf32>
    %c3_106 = arith.constant 3 : index
    %c4_107 = arith.constant 4 : index
    %299 = memref.load %arg2[%c3_106, %c4_107] : memref<12x6xf32, #tpu.memory_space<smem>>
    %300 = vector.extract_strided_slice %0 {offsets = [3, 0], sizes = [1, 128], strides = [1, 1]} : vector<12x128xf32> to vector<1x128xf32>
    %301 = vector.broadcast %299 : f32 to vector<1x128xf32>
    %302 = arith.mulf %301, %300 : vector<1x128xf32>
    %303 = arith.addf %298, %302 : vector<1x128xf32>
    %c4_108 = arith.constant 4 : index
    %c4_109 = arith.constant 4 : index
    %304 = memref.load %arg2[%c4_108, %c4_109] : memref<12x6xf32, #tpu.memory_space<smem>>
    %305 = vector.extract_strided_slice %0 {offsets = [4, 0], sizes = [1, 128], strides = [1, 1]} : vector<12x128xf32> to vector<1x128xf32>
    %306 = vector.broadcast %304 : f32 to vector<1x128xf32>
    %307 = arith.mulf %306, %305 : vector<1x128xf32>
    %308 = arith.addf %303, %307 : vector<1x128xf32>
    %c5_110 = arith.constant 5 : index
    %c4_111 = arith.constant 4 : index
    %309 = memref.load %arg2[%c5_110, %c4_111] : memref<12x6xf32, #tpu.memory_space<smem>>
    %310 = vector.extract_strided_slice %0 {offsets = [5, 0], sizes = [1, 128], strides = [1, 1]} : vector<12x128xf32> to vector<1x128xf32>
    %311 = vector.broadcast %309 : f32 to vector<1x128xf32>
    %312 = arith.mulf %311, %310 : vector<1x128xf32>
    %313 = arith.addf %308, %312 : vector<1x128xf32>
    %c6_112 = arith.constant 6 : index
    %c4_113 = arith.constant 4 : index
    %314 = memref.load %arg2[%c6_112, %c4_113] : memref<12x6xf32, #tpu.memory_space<smem>>
    %315 = vector.extract_strided_slice %0 {offsets = [6, 0], sizes = [1, 128], strides = [1, 1]} : vector<12x128xf32> to vector<1x128xf32>
    %316 = vector.broadcast %314 : f32 to vector<1x128xf32>
    %317 = arith.mulf %316, %315 : vector<1x128xf32>
    %318 = arith.addf %313, %317 : vector<1x128xf32>
    %c7_114 = arith.constant 7 : index
    %c4_115 = arith.constant 4 : index
    %319 = memref.load %arg2[%c7_114, %c4_115] : memref<12x6xf32, #tpu.memory_space<smem>>
    %320 = vector.extract_strided_slice %0 {offsets = [7, 0], sizes = [1, 128], strides = [1, 1]} : vector<12x128xf32> to vector<1x128xf32>
    %321 = vector.broadcast %319 : f32 to vector<1x128xf32>
    %322 = arith.mulf %321, %320 : vector<1x128xf32>
    %323 = arith.addf %318, %322 : vector<1x128xf32>
    %c8_116 = arith.constant 8 : index
    %c4_117 = arith.constant 4 : index
    %324 = memref.load %arg2[%c8_116, %c4_117] : memref<12x6xf32, #tpu.memory_space<smem>>
    %325 = vector.extract_strided_slice %0 {offsets = [8, 0], sizes = [1, 128], strides = [1, 1]} : vector<12x128xf32> to vector<1x128xf32>
    %326 = vector.broadcast %324 : f32 to vector<1x128xf32>
    %327 = arith.mulf %326, %325 : vector<1x128xf32>
    %328 = arith.addf %323, %327 : vector<1x128xf32>
    %c9_118 = arith.constant 9 : index
    %c4_119 = arith.constant 4 : index
    %329 = memref.load %arg2[%c9_118, %c4_119] : memref<12x6xf32, #tpu.memory_space<smem>>
    %330 = vector.extract_strided_slice %0 {offsets = [9, 0], sizes = [1, 128], strides = [1, 1]} : vector<12x128xf32> to vector<1x128xf32>
    %331 = vector.broadcast %329 : f32 to vector<1x128xf32>
    %332 = arith.mulf %331, %330 : vector<1x128xf32>
    %333 = arith.addf %328, %332 : vector<1x128xf32>
    %c10_120 = arith.constant 10 : index
    %c4_121 = arith.constant 4 : index
    %334 = memref.load %arg2[%c10_120, %c4_121] : memref<12x6xf32, #tpu.memory_space<smem>>
    %335 = vector.extract_strided_slice %0 {offsets = [10, 0], sizes = [1, 128], strides = [1, 1]} : vector<12x128xf32> to vector<1x128xf32>
    %336 = vector.broadcast %334 : f32 to vector<1x128xf32>
    %337 = arith.mulf %336, %335 : vector<1x128xf32>
    %338 = arith.addf %333, %337 : vector<1x128xf32>
    %c11_122 = arith.constant 11 : index
    %c4_123 = arith.constant 4 : index
    %339 = memref.load %arg2[%c11_122, %c4_123] : memref<12x6xf32, #tpu.memory_space<smem>>
    %340 = vector.extract_strided_slice %0 {offsets = [11, 0], sizes = [1, 128], strides = [1, 1]} : vector<12x128xf32> to vector<1x128xf32>
    %341 = vector.broadcast %339 : f32 to vector<1x128xf32>
    %342 = arith.mulf %341, %340 : vector<1x128xf32>
    %343 = arith.addf %338, %342 : vector<1x128xf32>
    %c4_124 = arith.constant 4 : index
    %344 = memref.load %arg4[%c4_124] : memref<6xf32, #tpu.memory_space<smem>>
    %cst_125 = arith.constant 0.000000e+00 : f32
    %345 = vector.broadcast %cst_125 : f32 to vector<1x128xf32>
    %346 = arith.maximumf %343, %345 : vector<1x128xf32>
    %347 = vector.broadcast %344 : f32 to vector<1x128xf32>
    %348 = arith.mulf %347, %346 : vector<1x128xf32>
    %349 = arith.addf %280, %348 : vector<1x128xf32>
    %c5_126 = arith.constant 5 : index
    %350 = memref.load %arg3[%c5_126] : memref<6xf32, #tpu.memory_space<smem>>
    %351 = vector.broadcast %350 : f32 to vector<1x128xf32>
    %352 = arith.addf %1, %351 : vector<1x128xf32>
    %c0_127 = arith.constant 0 : index
    %c5_128 = arith.constant 5 : index
    %353 = memref.load %arg2[%c0_127, %c5_128] : memref<12x6xf32, #tpu.memory_space<smem>>
    %354 = vector.extract_strided_slice %0 {offsets = [0, 0], sizes = [1, 128], strides = [1, 1]} : vector<12x128xf32> to vector<1x128xf32>
    %355 = vector.broadcast %353 : f32 to vector<1x128xf32>
    %356 = arith.mulf %355, %354 : vector<1x128xf32>
    %357 = arith.addf %352, %356 : vector<1x128xf32>
    %c1_129 = arith.constant 1 : index
    %c5_130 = arith.constant 5 : index
    %358 = memref.load %arg2[%c1_129, %c5_130] : memref<12x6xf32, #tpu.memory_space<smem>>
    %359 = vector.extract_strided_slice %0 {offsets = [1, 0], sizes = [1, 128], strides = [1, 1]} : vector<12x128xf32> to vector<1x128xf32>
    %360 = vector.broadcast %358 : f32 to vector<1x128xf32>
    %361 = arith.mulf %360, %359 : vector<1x128xf32>
    %362 = arith.addf %357, %361 : vector<1x128xf32>
    %c2_131 = arith.constant 2 : index
    %c5_132 = arith.constant 5 : index
    %363 = memref.load %arg2[%c2_131, %c5_132] : memref<12x6xf32, #tpu.memory_space<smem>>
    %364 = vector.extract_strided_slice %0 {offsets = [2, 0], sizes = [1, 128], strides = [1, 1]} : vector<12x128xf32> to vector<1x128xf32>
    %365 = vector.broadcast %363 : f32 to vector<1x128xf32>
    %366 = arith.mulf %365, %364 : vector<1x128xf32>
    %367 = arith.addf %362, %366 : vector<1x128xf32>
    %c3_133 = arith.constant 3 : index
    %c5_134 = arith.constant 5 : index
    %368 = memref.load %arg2[%c3_133, %c5_134] : memref<12x6xf32, #tpu.memory_space<smem>>
    %369 = vector.extract_strided_slice %0 {offsets = [3, 0], sizes = [1, 128], strides = [1, 1]} : vector<12x128xf32> to vector<1x128xf32>
    %370 = vector.broadcast %368 : f32 to vector<1x128xf32>
    %371 = arith.mulf %370, %369 : vector<1x128xf32>
    %372 = arith.addf %367, %371 : vector<1x128xf32>
    %c4_135 = arith.constant 4 : index
    %c5_136 = arith.constant 5 : index
    %373 = memref.load %arg2[%c4_135, %c5_136] : memref<12x6xf32, #tpu.memory_space<smem>>
    %374 = vector.extract_strided_slice %0 {offsets = [4, 0], sizes = [1, 128], strides = [1, 1]} : vector<12x128xf32> to vector<1x128xf32>
    %375 = vector.broadcast %373 : f32 to vector<1x128xf32>
    %376 = arith.mulf %375, %374 : vector<1x128xf32>
    %377 = arith.addf %372, %376 : vector<1x128xf32>
    %c5_137 = arith.constant 5 : index
    %c5_138 = arith.constant 5 : index
    %378 = memref.load %arg2[%c5_137, %c5_138] : memref<12x6xf32, #tpu.memory_space<smem>>
    %379 = vector.extract_strided_slice %0 {offsets = [5, 0], sizes = [1, 128], strides = [1, 1]} : vector<12x128xf32> to vector<1x128xf32>
    %380 = vector.broadcast %378 : f32 to vector<1x128xf32>
    %381 = arith.mulf %380, %379 : vector<1x128xf32>
    %382 = arith.addf %377, %381 : vector<1x128xf32>
    %c6_139 = arith.constant 6 : index
    %c5_140 = arith.constant 5 : index
    %383 = memref.load %arg2[%c6_139, %c5_140] : memref<12x6xf32, #tpu.memory_space<smem>>
    %384 = vector.extract_strided_slice %0 {offsets = [6, 0], sizes = [1, 128], strides = [1, 1]} : vector<12x128xf32> to vector<1x128xf32>
    %385 = vector.broadcast %383 : f32 to vector<1x128xf32>
    %386 = arith.mulf %385, %384 : vector<1x128xf32>
    %387 = arith.addf %382, %386 : vector<1x128xf32>
    %c7_141 = arith.constant 7 : index
    %c5_142 = arith.constant 5 : index
    %388 = memref.load %arg2[%c7_141, %c5_142] : memref<12x6xf32, #tpu.memory_space<smem>>
    %389 = vector.extract_strided_slice %0 {offsets = [7, 0], sizes = [1, 128], strides = [1, 1]} : vector<12x128xf32> to vector<1x128xf32>
    %390 = vector.broadcast %388 : f32 to vector<1x128xf32>
    %391 = arith.mulf %390, %389 : vector<1x128xf32>
    %392 = arith.addf %387, %391 : vector<1x128xf32>
    %c8_143 = arith.constant 8 : index
    %c5_144 = arith.constant 5 : index
    %393 = memref.load %arg2[%c8_143, %c5_144] : memref<12x6xf32, #tpu.memory_space<smem>>
    %394 = vector.extract_strided_slice %0 {offsets = [8, 0], sizes = [1, 128], strides = [1, 1]} : vector<12x128xf32> to vector<1x128xf32>
    %395 = vector.broadcast %393 : f32 to vector<1x128xf32>
    %396 = arith.mulf %395, %394 : vector<1x128xf32>
    %397 = arith.addf %392, %396 : vector<1x128xf32>
    %c9_145 = arith.constant 9 : index
    %c5_146 = arith.constant 5 : index
    %398 = memref.load %arg2[%c9_145, %c5_146] : memref<12x6xf32, #tpu.memory_space<smem>>
    %399 = vector.extract_strided_slice %0 {offsets = [9, 0], sizes = [1, 128], strides = [1, 1]} : vector<12x128xf32> to vector<1x128xf32>
    %400 = vector.broadcast %398 : f32 to vector<1x128xf32>
    %401 = arith.mulf %400, %399 : vector<1x128xf32>
    %402 = arith.addf %397, %401 : vector<1x128xf32>
    %c10_147 = arith.constant 10 : index
    %c5_148 = arith.constant 5 : index
    %403 = memref.load %arg2[%c10_147, %c5_148] : memref<12x6xf32, #tpu.memory_space<smem>>
    %404 = vector.extract_strided_slice %0 {offsets = [10, 0], sizes = [1, 128], strides = [1, 1]} : vector<12x128xf32> to vector<1x128xf32>
    %405 = vector.broadcast %403 : f32 to vector<1x128xf32>
    %406 = arith.mulf %405, %404 : vector<1x128xf32>
    %407 = arith.addf %402, %406 : vector<1x128xf32>
    %c11_149 = arith.constant 11 : index
    %c5_150 = arith.constant 5 : index
    %408 = memref.load %arg2[%c11_149, %c5_150] : memref<12x6xf32, #tpu.memory_space<smem>>
    %409 = vector.extract_strided_slice %0 {offsets = [11, 0], sizes = [1, 128], strides = [1, 1]} : vector<12x128xf32> to vector<1x128xf32>
    %410 = vector.broadcast %408 : f32 to vector<1x128xf32>
    %411 = arith.mulf %410, %409 : vector<1x128xf32>
    %412 = arith.addf %407, %411 : vector<1x128xf32>
    %c5_151 = arith.constant 5 : index
    %413 = memref.load %arg4[%c5_151] : memref<6xf32, #tpu.memory_space<smem>>
    %cst_152 = arith.constant 0.000000e+00 : f32
    %414 = vector.broadcast %cst_152 : f32 to vector<1x128xf32>
    %415 = arith.maximumf %412, %414 : vector<1x128xf32>
    %416 = vector.broadcast %413 : f32 to vector<1x128xf32>
    %417 = arith.mulf %416, %415 : vector<1x128xf32>
    %418 = arith.addf %349, %417 : vector<1x128xf32>
    %419 = arith.negf %418 : vector<1x128xf32>
    %420 = math.exp %419 : vector<1x128xf32>
    %cst_153 = arith.constant 1.000000e+00 : f32
    %421 = vector.broadcast %cst_153 : f32 to vector<1x128xf32>
    %422 = arith.addf %421, %420 : vector<1x128xf32>
    %423 = arith.divf %421, %422 : vector<1x128xf32>
    %c0_154 = arith.constant 0 : index
    %c0_155 = arith.constant 0 : index
    %424 = vector.load %arg6[%c0_154, %c0_155] : memref<1x128xf32, #tpu.memory_space<vmem>>, vector<1x128xf32>
    tpu.vector_store %arg6[%c0_154, %c0_155], %423 {strides = array<i32>} : memref<1x128xf32, #tpu.memory_space<vmem>>, vector<1x128xf32>,
    return
  }
  func.func @transform_0(%arg0: i32) -> (i32, i32) {
    %c0_i32 = arith.constant 0 : i32
    %c0_i32_0 = arith.constant 0 : i32
    return %c0_i32, %arg0 : i32, i32
  }
  func.func @transform_1(%arg0: i32) -> (i32, i32) {
    %c0_i32 = arith.constant 0 : i32
    %c0_i32_0 = arith.constant 0 : i32
    %c0_i32_1 = arith.constant 0 : i32
    return %c0_i32, %c0_i32_0 : i32, i32
  }
  func.func @transform_2(%arg0: i32) -> i32 {
    %c0_i32 = arith.constant 0 : i32
    %c0_i32_0 = arith.constant 0 : i32
    return %c0_i32 : i32
  }
  func.func @transform_3(%arg0: i32) -> i32 {
    %c0_i32 = arith.constant 0 : i32
    %c0_i32_0 = arith.constant 0 : i32
    return %c0_i32 : i32
  }
  func.func @transform_4(%arg0: i32) -> i32 {
    %c0_i32 = arith.constant 0 : i32
    %c0_i32_0 = arith.constant 0 : i32
    return %c0_i32 : i32
  }
  func.func @transform_5(%arg0: i32) -> (i32, i32) {
    %c0_i32 = arith.constant 0 : i32
    %c0_i32_0 = arith.constant 0 : i32
    return %c0_i32, %arg0 : i32, i32
  }
}

</mosaic_0001>

<llo_original>
// kernel: tpu_custom_call.1
$region0: #{tpu_custom_call.1}
  #allocation0 [shape = 'u32[]', space=smem, size = 0x4, offset = 0x4, fixed_abs, tag = 'smem constant byte address 0x4 - core index']
  #allocation1 [shape = 'u32[144,128]{1,0:T(1,128)}', space=vmem, size = 0x12000, scoped, tag = 'internal scratch']
  #allocation2 [shape = 'f32[1]{0:T(128)S(6)}', space=smem, size = 0x200, scoped, tag = 'scoped memory for tpu_custom_call.1']
  %s0 = inlined_call_operand.vmem [shape: f32[12,128], index: 0, kind: input, shape index: {}]
  %s1 = inlined_call_operand.vmem [shape: f32[12,6], index: 1, kind: input, shape index: {}]
  %s2 = inlined_call_operand.vmem [shape: f32[6], index: 2, kind: input, shape index: {}]
  %s3 = inlined_call_operand.vmem [shape: f32[6], index: 3, kind: input, shape index: {}]
  %s4 = inlined_call_operand.<no memory space> [shape: f32[1], index: 4, kind: input, shape index: {}]
  %s5 = inlined_call_operand.hbm [shape: f32[1,128], index: 5, kind: output, shape index: {}]
  %s6 = sld [smem:[#allocation0]]
  $region42: #{tpu_custom_call.1} parent=0
    _
  %s8 = ssub.s32 1, %s6
  %s9 = scalar_select 0, %s8, %s6
  %10 = sst [smem:[#allocation2]] %s4
  $region1: #{tpu_custom_call.1} parent=0
    #allocation3 [shape = 'u8[8192]{0}', space=smem, size = 0x2000, scoped, tag = 'input window, operand 1, single buffered']
    #allocation4 [shape = 's32[1]{0}', space=sflag, size = 0x4, scoped, tag = 'scoped memory for tpu_custom_call.1']
    #allocation5 [shape = 's32[1]{0}', space=sflag, size = 0x4, scoped, tag = 'scoped memory for tpu_custom_call.1']
    #allocation6 [shape = 'u8[512]{0}', space=smem, size = 0x200, scoped, tag = 'input window, operand 2, single buffered']
    #allocation7 [shape = 's32[1]{0}', space=sflag, size = 0x4, scoped, tag = 'scoped memory for tpu_custom_call.1']
    #allocation8 [shape = 'u8[512]{0}', space=smem, size = 0x200, scoped, tag = 'input window, operand 3, single buffered']
    #allocation9 [shape = 'u8[512]{0}', space=vmem, size = 0x400, scoped, tag = 'output window, operand 0, single buffered']
    %11 = vsyncpa [#allocation5], 0
    %12 = vsyncpa [#allocation7], 0
    %13 = vsyncpa [#allocation4], 0
    // Predicated region
    $region2: #{tpu_custom_call.1} parent=1 // pred_check
      _
    $region3: #{tpu_custom_call.1} parent=1 // pred_check_branch
      %15 = sbr.rel (0) target = $region5
    $region4: #{tpu_custom_call.1} parent=1 // pred_region
      _
    $region5: #{tpu_custom_call.1} parent=1 // pred_fallthru
      _
    // Predicated region
    $region6: #{tpu_custom_call.1} parent=1 // pred_check
      _
    $region7: #{tpu_custom_call.1} parent=1 // pred_check_branch
      %17 = sbr.rel (0) target = $region9
    $region8: #{tpu_custom_call.1} parent=1 // pred_region
      %s19 = ssub.s32 256, 256
      %20 = vsyncadd [#allocation5], %s19
      %s21 = sshll.u32 %s1, 4
      %s22 = int_to_ptr.vmem [resolvable:$true] %s21
      %27 = dma.vmem_to_smem %s22, 256, [#allocation3], [#allocation5], 128, 128, 8
    $region9: #{tpu_custom_call.1} parent=1 // pred_fallthru
      _
    // Predicated region
    $region10: #{tpu_custom_call.1} parent=1 // pred_check
      _
    $region11: #{tpu_custom_call.1} parent=1 // pred_check_branch
      %29 = sbr.rel (0) target = $region13
    $region12: #{tpu_custom_call.1} parent=1 // pred_region
      %s31 = ssub.s32 16, 16
      %32 = vsyncadd [#allocation7], %s31
      %s34 = sshll.u32 %s2, 4
      %s35 = int_to_ptr.vmem [resolvable:$true] %s34
      %37 = dma.vmem_to_smem %s35, 16, [#allocation6], [#allocation7]
    $region13: #{tpu_custom_call.1} parent=1 // pred_fallthru
      _
    // Predicated region
    $region14: #{tpu_custom_call.1} parent=1 // pred_check
      _
    $region15: #{tpu_custom_call.1} parent=1 // pred_check_branch
      %39 = sbr.rel (0) target = $region17
    $region16: #{tpu_custom_call.1} parent=1 // pred_region
      %s41 = ssub.s32 16, 16
      %42 = vsyncadd [#allocation7], %s41
      %s44 = sshll.u32 %s3, 4
      %s45 = int_to_ptr.vmem [resolvable:$true] %s44
      %47 = dma.vmem_to_smem %s45, 16, [#allocation8], [#allocation7]
    $region17: #{tpu_custom_call.1} parent=1 // pred_fallthru
      _
    // Predicated region
    $region18: #{tpu_custom_call.1} parent=1 // pred_check
      _
    $region19: #{tpu_custom_call.1} parent=1 // pred_check_branch
      %49 = sbr.rel (0) target = $region21
    $region20: #{tpu_custom_call.1} parent=1 // pred_region
      _
    $region21: #{tpu_custom_call.1} parent=1 // pred_fallthru
      _
    // Predicated region
    $region22: #{tpu_custom_call.1} parent=1 // pred_check
      _
    $region23: #{tpu_custom_call.1} parent=1 // pred_check_branch
      %51 = sbr.rel (0) target = $region25
    $region24: #{tpu_custom_call.1} parent=1 // pred_region
      %52 = dma.done [#allocation5], 256
    $region25: #{tpu_custom_call.1} parent=1 // pred_fallthru
      _
    // Predicated region
    $region26: #{tpu_custom_call.1} parent=1 // pred_check
      _
    $region27: #{tpu_custom_call.1} parent=1 // pred_check_branch
      %54 = sbr.rel (0) target = $region29
    $region28: #{tpu_custom_call.1} parent=1 // pred_region
      %55 = dma.done [#allocation7], 16
    $region29: #{tpu_custom_call.1} parent=1 // pred_fallthru
      _
    // Predicated region
    $region30: #{tpu_custom_call.1} parent=1 // pred_check
      _
    $region31: #{tpu_custom_call.1} parent=1 // pred_check_branch
      %57 = sbr.rel (0) target = $region33
    $region32: #{tpu_custom_call.1} parent=1 // pred_region
      %58 = dma.done [#allocation7], 16
    $region33: #{tpu_custom_call.1} parent=1 // pred_fallthru
      _
    %59 = sfence
    %v60 = vld [vmem:[%s0] sm:$0xff]
    %v61 = vld [vmem:[%s0 + $0x8] sm:$0xf]
    %s62 = sld [smem:[#allocation2]]
    %v63 = vstv %s62
    %v64 = vadd.f32 %v63, 0.0
    %s65 = sld [smem:[#allocation6]]
    %v66 = vstv %s65
    %v67 = vadd.f32 %v66, 0.0
    %s68 = sld [smem:[#allocation3]]
    %v69 = vstv %s68
    %v70 = vmul.f32 %v69, %v60
    %v71 = vadd.f32 %v67, %v70
    %s72 = sld [smem:[#allocation3 + $0x80]]
    %v73 = vstv %s72
    %v74 = vmul.f32 %v73, %v60
    %v76 = vrot.slane %v74, 1
    %v78 = vadd.f32 %v71, %v76
    %s79 = sld [smem:[#allocation3 + $0x100]]
    %v80 = vstv %s79
    %v81 = vmul.f32 %v80, %v60
    %v83 = vrot.slane %v81, 2
    %v85 = vadd.f32 %v78, %v83
    %s86 = sld [smem:[#allocation3 + $0x180]]
    %v87 = vstv %s86
    %v88 = vmul.f32 %v87, %v60
    %v90 = vrot.slane %v88, 3
    %v92 = vadd.f32 %v85, %v90
    %s93 = sld [smem:[#allocation3 + $0x200]]
    %v94 = vstv %s93
    %v95 = vmul.f32 %v94, %v60
    %v97 = vrot.slane %v95, 4
    %v99 = vadd.f32 %v92, %v97
    %s100 = sld [smem:[#allocation3 + $0x280]]
    %v101 = vstv %s100
    %v102 = vmul.f32 %v101, %v60
    %v104 = vrot.slane %v102, 5
    %v106 = vadd.f32 %v99, %v104
    %s107 = sld [smem:[#allocation3 + $0x300]]
    %v108 = vstv %s107
    %v109 = vmul.f32 %v108, %v60
    %v111 = vrot.slane %v109, 6
    %v113 = vadd.f32 %v106, %v111
    %s114 = sld [smem:[#allocation3 + $0x380]]
    %v115 = vstv %s114
    %v116 = vmul.f32 %v115, %v60
    %v118 = vrot.slane %v116, 7
    %v120 = vadd.f32 %v113, %v118
    %s121 = sld [smem:[#allocation3 + $0x400]]
    %v122 = vstv %s121
    %v123 = vmul.f32 %v122, %v61
    %v124 = vadd.f32 %v120, %v123
    %s125 = sld [smem:[#allocation3 + $0x480]]
    %v126 = vstv %s125
    %v127 = vmul.f32 %v126, %v61
    %v129 = vrot.slane %v127, 1
    %v131 = vadd.f32 %v124, %v129
    %s132 = sld [smem:[#allocation3 + $0x500]]
    %v133 = vstv %s132
    %v134 = vmul.f32 %v133, %v61
    %v136 = vrot.slane %v134, 2
    %v138 = vadd.f32 %v131, %v136
    %s139 = sld [smem:[#allocation3 + $0x580]]
    %v140 = vstv %s139
    %v141 = vmul.f32 %v140, %v61
    %v143 = vrot.slane %v141, 3
    %v145 = vadd.f32 %v138, %v143
    %s146 = sld [smem:[#allocation8]]
    %v147 = vmax.f32 %v145, 0.0
    %v148 = vstv %s146
    %v149 = vmul.f32 %v148, %v147
    %v150 = vadd.f32 %v64, %v149
    %s151 = sld [smem:[#allocation6 + $0x1]]
    %v152 = vstv %s151
    %v153 = vadd.f32 %v152, 0.0
    %s154 = sld [smem:[#allocation3 + $0x1]]
    %v155 = vstv %s154
    %v156 = vmul.f32 %v155, %v60
    %v157 = vadd.f32 %v153, %v156
    %s158 = sld [smem:[#allocation3 + $0x81]]
    %v159 = vstv %s158
    %v160 = vmul.f32 %v159, %v60
    %v162 = vrot.slane %v160, 1
    %v164 = vadd.f32 %v157, %v162
    %s165 = sld [smem:[#allocation3 + $0x101]]
    %v166 = vstv %s165
    %v167 = vmul.f32 %v166, %v60
    %v169 = vrot.slane %v167, 2
    %v171 = vadd.f32 %v164, %v169
    %s172 = sld [smem:[#allocation3 + $0x181]]
    %v173 = vstv %s172
    %v174 = vmul.f32 %v173, %v60
    %v176 = vrot.slane %v174, 3
    %v178 = vadd.f32 %v171, %v176
    %s179 = sld [smem:[#allocation3 + $0x201]]
    %v180 = vstv %s179
    %v181 = vmul.f32 %v180, %v60
    %v183 = vrot.slane %v181, 4
    %v185 = vadd.f32 %v178, %v183
    %s186 = sld [smem:[#allocation3 + $0x281]]
    %v187 = vstv %s186
    %v188 = vmul.f32 %v187, %v60
    %v190 = vrot.slane %v188, 5
    %v192 = vadd.f32 %v185, %v190
    %s193 = sld [smem:[#allocation3 + $0x301]]
    %v194 = vstv %s193
    %v195 = vmul.f32 %v194, %v60
    %v197 = vrot.slane %v195, 6
    %v199 = vadd.f32 %v192, %v197
    %s200 = sld [smem:[#allocation3 + $0x381]]
    %v201 = vstv %s200
    %v202 = vmul.f32 %v201, %v60
    %v204 = vrot.slane %v202, 7
    %v206 = vadd.f32 %v199, %v204
    %s207 = sld [smem:[#allocation3 + $0x401]]
    %v208 = vstv %s207
    %v209 = vmul.f32 %v208, %v61
    %v210 = vadd.f32 %v206, %v209
    %s211 = sld [smem:[#allocation3 + $0x481]]
    %v212 = vstv %s211
    %v213 = vmul.f32 %v212, %v61
    %v215 = vrot.slane %v213, 1
    %v217 = vadd.f32 %v210, %v215
    %s218 = sld [smem:[#allocation3 + $0x501]]
    %v219 = vstv %s218
    %v220 = vmul.f32 %v219, %v61
    %v222 = vrot.slane %v220, 2
    %v224 = vadd.f32 %v217, %v222
    %s225 = sld [smem:[#allocation3 + $0x581]]
    %v226 = vstv %s225
    %v227 = vmul.f32 %v226, %v61
    %v229 = vrot.slane %v227, 3
    %v231 = vadd.f32 %v224, %v229
    %s232 = sld [smem:[#allocation8 + $0x1]]
    %v233 = vmax.f32 %v231, 0.0
    %v234 = vstv %s232
    %v235 = vmul.f32 %v234, %v233
    %v236 = vadd.f32 %v150, %v235
    %s237 = sld [smem:[#allocation6 + $0x2]]
    %v238 = vstv %s237
    %v239 = vadd.f32 %v238, 0.0
    %s240 = sld [smem:[#allocation3 + $0x2]]
    %v241 = vstv %s240
    %v242 = vmul.f32 %v241, %v60
    %v243 = vadd.f32 %v239, %v242
    %s244 = sld [smem:[#allocation3 + $0x82]]
    %v245 = vstv %s244
    %v246 = vmul.f32 %v245, %v60
    %v248 = vrot.slane %v246, 1
    %v250 = vadd.f32 %v243, %v248
    %s251 = sld [smem:[#allocation3 + $0x102]]
    %v252 = vstv %s251
    %v253 = vmul.f32 %v252, %v60
    %v255 = vrot.slane %v253, 2
    %v257 = vadd.f32 %v250, %v255
    %s258 = sld [smem:[#allocation3 + $0x182]]
    %v259 = vstv %s258
    %v260 = vmul.f32 %v259, %v60
    %v262 = vrot.slane %v260, 3
    %v264 = vadd.f32 %v257, %v262
    %s265 = sld [smem:[#allocation3 + $0x202]]
    %v266 = vstv %s265
    %v267 = vmul.f32 %v266, %v60
    %v269 = vrot.slane %v267, 4
    %v271 = vadd.f32 %v264, %v269
    %s272 = sld [smem:[#allocation3 + $0x282]]
    %v273 = vstv %s272
    %v274 = vmul.f32 %v273, %v60
    %v276 = vrot.slane %v274, 5
    %v278 = vadd.f32 %v271, %v276
    %s279 = sld [smem:[#allocation3 + $0x302]]
    %v280 = vstv %s279
    %v281 = vmul.f32 %v280, %v60
    %v283 = vrot.slane %v281, 6
    %v285 = vadd.f32 %v278, %v283
    %s286 = sld [smem:[#allocation3 + $0x382]]
    %v287 = vstv %s286
    %v288 = vmul.f32 %v287, %v60
    %v290 = vrot.slane %v288, 7
    %v292 = vadd.f32 %v285, %v290
    %s293 = sld [smem:[#allocation3 + $0x402]]
    %v294 = vstv %s293
    %v295 = vmul.f32 %v294, %v61
    %v296 = vadd.f32 %v292, %v295
    %s297 = sld [smem:[#allocation3 + $0x482]]
    %v298 = vstv %s297
    %v299 = vmul.f32 %v298, %v61
    %v301 = vrot.slane %v299, 1
    %v303 = vadd.f32 %v296, %v301
    %s304 = sld [smem:[#allocation3 + $0x502]]
    %v305 = vstv %s304
    %v306 = vmul.f32 %v305, %v61
    %v308 = vrot.slane %v306, 2
    %v310 = vadd.f32 %v303, %v308
    %s311 = sld [smem:[#allocation3 + $0x582]]
    %v312 = vstv %s311
    %v313 = vmul.f32 %v312, %v61
    %v315 = vrot.slane %v313, 3
    %v317 = vadd.f32 %v310, %v315
    %s318 = sld [smem:[#allocation8 + $0x2]]
    %v319 = vmax.f32 %v317, 0.0
    %v320 = vstv %s318
    %v321 = vmul.f32 %v320, %v319
    %v322 = vadd.f32 %v236, %v321
    %s323 = sld [smem:[#allocation6 + $0x3]]
    %v324 = vstv %s323
    %v325 = vadd.f32 %v324, 0.0
    %s326 = sld [smem:[#allocation3 + $0x3]]
    %v327 = vstv %s326
    %v328 = vmul.f32 %v327, %v60
    %v329 = vadd.f32 %v325, %v328
    %s330 = sld [smem:[#allocation3 + $0x83]]
    %v331 = vstv %s330
    %v332 = vmul.f32 %v331, %v60
    %v334 = vrot.slane %v332, 1
    %v336 = vadd.f32 %v329, %v334
    %s337 = sld [smem:[#allocation3 + $0x103]]
    %v338 = vstv %s337
    %v339 = vmul.f32 %v338, %v60
    %v341 = vrot.slane %v339, 2
    %v343 = vadd.f32 %v336, %v341
    %s344 = sld [smem:[#allocation3 + $0x183]]
    %v345 = vstv %s344
    %v346 = vmul.f32 %v345, %v60
    %v348 = vrot.slane %v346, 3
    %v350 = vadd.f32 %v343, %v348
    %s351 = sld [smem:[#allocation3 + $0x203]]
    %v352 = vstv %s351
    %v353 = vmul.f32 %v352, %v60
    %v355 = vrot.slane %v353, 4
    %v357 = vadd.f32 %v350, %v355
    %s358 = sld [smem:[#allocation3 + $0x283]]
    %v359 = vstv %s358
    %v360 = vmul.f32 %v359, %v60
    %v362 = vrot.slane %v360, 5
    %v364 = vadd.f32 %v357, %v362
    %s365 = sld [smem:[#allocation3 + $0x303]]
    %v366 = vstv %s365
    %v367 = vmul.f32 %v366, %v60
    %v369 = vrot.slane %v367, 6
    %v371 = vadd.f32 %v364, %v369
    %s372 = sld [smem:[#allocation3 + $0x383]]
    %v373 = vstv %s372
    %v374 = vmul.f32 %v373, %v60
    %v376 = vrot.slane %v374, 7
    %v378 = vadd.f32 %v371, %v376
    %s379 = sld [smem:[#allocation3 + $0x403]]
    %v380 = vstv %s379
    %v381 = vmul.f32 %v380, %v61
    %v382 = vadd.f32 %v378, %v381
    %s383 = sld [smem:[#allocation3 + $0x483]]
    %v384 = vstv %s383
    %v385 = vmul.f32 %v384, %v61
    %v387 = vrot.slane %v385, 1
    %v389 = vadd.f32 %v382, %v387
    %s390 = sld [smem:[#allocation3 + $0x503]]
    %v391 = vstv %s390
    %v392 = vmul.f32 %v391, %v61
    %v394 = vrot.slane %v392, 2
    %v396 = vadd.f32 %v389, %v394
    %s397 = sld [smem:[#allocation3 + $0x583]]
    %v398 = vstv %s397
    %v399 = vmul.f32 %v398, %v61
    %v401 = vrot.slane %v399, 3
    %v403 = vadd.f32 %v396, %v401
    %s404 = sld [smem:[#allocation8 + $0x3]]
    %v405 = vmax.f32 %v403, 0.0
    %v406 = vstv %s404
    %v407 = vmul.f32 %v406, %v405
    %v408 = vadd.f32 %v322, %v407
    %s409 = sld [smem:[#allocation6 + $0x4]]
    %v410 = vstv %s409
    %v411 = vadd.f32 %v410, 0.0
    %s412 = sld [smem:[#allocation3 + $0x4]]
    %v413 = vstv %s412
    %v414 = vmul.f32 %v413, %v60
    %v415 = vadd.f32 %v411, %v414
    %s416 = sld [smem:[#allocation3 + $0x84]]
    %v417 = vstv %s416
    %v418 = vmul.f32 %v417, %v60
    %v420 = vrot.slane %v418, 1
    %v422 = vadd.f32 %v415, %v420
    %s423 = sld [smem:[#allocation3 + $0x104]]
    %v424 = vstv %s423
    %v425 = vmul.f32 %v424, %v60
    %v427 = vrot.slane %v425, 2
    %v429 = vadd.f32 %v422, %v427
    %s430 = sld [smem:[#allocation3 + $0x184]]
    %v431 = vstv %s430
    %v432 = vmul.f32 %v431, %v60
    %v434 = vrot.slane %v432, 3
    %v436 = vadd.f32 %v429, %v434
    %s437 = sld [smem:[#allocation3 + $0x204]]
    %v438 = vstv %s437
    %v439 = vmul.f32 %v438, %v60
    %v441 = vrot.slane %v439, 4
    %v443 = vadd.f32 %v436, %v441
    %s444 = sld [smem:[#allocation3 + $0x284]]
    %v445 = vstv %s444
    %v446 = vmul.f32 %v445, %v60
    %v448 = vrot.slane %v446, 5
    %v450 = vadd.f32 %v443, %v448
    %s451 = sld [smem:[#allocation3 + $0x304]]
    %v452 = vstv %s451
    %v453 = vmul.f32 %v452, %v60
    %v455 = vrot.slane %v453, 6
    %v457 = vadd.f32 %v450, %v455
    %s458 = sld [smem:[#allocation3 + $0x384]]
    %v459 = vstv %s458
    %v460 = vmul.f32 %v459, %v60
    %v462 = vrot.slane %v460, 7
    %v464 = vadd.f32 %v457, %v462
    %s465 = sld [smem:[#allocation3 + $0x404]]
    %v466 = vstv %s465
    %v467 = vmul.f32 %v466, %v61
    %v468 = vadd.f32 %v464, %v467
    %s469 = sld [smem:[#allocation3 + $0x484]]
    %v470 = vstv %s469
    %v471 = vmul.f32 %v470, %v61
    %v473 = vrot.slane %v471, 1
    %v475 = vadd.f32 %v468, %v473
    %s476 = sld [smem:[#allocation3 + $0x504]]
    %v477 = vstv %s476
    %v478 = vmul.f32 %v477, %v61
    %v480 = vrot.slane %v478, 2
    %v482 = vadd.f32 %v475, %v480
    %s483 = sld [smem:[#allocation3 + $0x584]]
    %v484 = vstv %s483
    %v485 = vmul.f32 %v484, %v61
    %v487 = vrot.slane %v485, 3
    %v489 = vadd.f32 %v482, %v487
    %s490 = sld [smem:[#allocation8 + $0x4]]
    %v491 = vmax.f32 %v489, 0.0
    %v492 = vstv %s490
    %v493 = vmul.f32 %v492, %v491
    %v494 = vadd.f32 %v408, %v493
    %s495 = sld [smem:[#allocation6 + $0x5]]
    %v496 = vstv %s495
    %v497 = vadd.f32 %v496, 0.0
    %s498 = sld [smem:[#allocation3 + $0x5]]
    %v499 = vstv %s498
    %v500 = vmul.f32 %v499, %v60
    %v501 = vadd.f32 %v497, %v500
    %s502 = sld [smem:[#allocation3 + $0x85]]
    %v503 = vstv %s502
    %v504 = vmul.f32 %v503, %v60
    %v506 = vrot.slane %v504, 1
    %v508 = vadd.f32 %v501, %v506
    %s509 = sld [smem:[#allocation3 + $0x105]]
    %v510 = vstv %s509
    %v511 = vmul.f32 %v510, %v60
    %v513 = vrot.slane %v511, 2
    %v515 = vadd.f32 %v508, %v513
    %s516 = sld [smem:[#allocation3 + $0x185]]
    %v517 = vstv %s516
    %v518 = vmul.f32 %v517, %v60
    %v520 = vrot.slane %v518, 3
    %v522 = vadd.f32 %v515, %v520
    %s523 = sld [smem:[#allocation3 + $0x205]]
    %v524 = vstv %s523
    %v525 = vmul.f32 %v524, %v60
    %v527 = vrot.slane %v525, 4
    %v529 = vadd.f32 %v522, %v527
    %s530 = sld [smem:[#allocation3 + $0x285]]
    %v531 = vstv %s530
    %v532 = vmul.f32 %v531, %v60
    %v534 = vrot.slane %v532, 5
    %v536 = vadd.f32 %v529, %v534
    %s537 = sld [smem:[#allocation3 + $0x305]]
    %v538 = vstv %s537
    %v539 = vmul.f32 %v538, %v60
    %v541 = vrot.slane %v539, 6
    %v543 = vadd.f32 %v536, %v541
    %s544 = sld [smem:[#allocation3 + $0x385]]
    %v545 = vstv %s544
    %v546 = vmul.f32 %v545, %v60
    %v548 = vrot.slane %v546, 7
    %v550 = vadd.f32 %v543, %v548
    %s551 = sld [smem:[#allocation3 + $0x405]]
    %v552 = vstv %s551
    %v553 = vmul.f32 %v552, %v61
    %v554 = vadd.f32 %v550, %v553
    %s555 = sld [smem:[#allocation3 + $0x485]]
    %v556 = vstv %s555
    %v557 = vmul.f32 %v556, %v61
    %v559 = vrot.slane %v557, 1
    %v561 = vadd.f32 %v554, %v559
    %s562 = sld [smem:[#allocation3 + $0x505]]
    %v563 = vstv %s562
    %v564 = vmul.f32 %v563, %v61
    %v566 = vrot.slane %v564, 2
    %v568 = vadd.f32 %v561, %v566
    %s569 = sld [smem:[#allocation3 + $0x585]]
    %v570 = vstv %s569
    %v571 = vmul.f32 %v570, %v61
    %v573 = vrot.slane %v571, 3
    %v575 = vadd.f32 %v568, %v573
    %s576 = sld [smem:[#allocation8 + $0x5]]
    %v577 = vmax.f32 %v575, 0.0
    %v578 = vstv %s576
    %v579 = vmul.f32 %v578, %v577
    %v580 = vadd.f32 %v494, %v579
    %v581 = vxor.u32 %v580, 2147483648
    %v582 = vmul.f32 %v581, 1.442695
    %v583 = vpow.pop %v582
    %v584 = vadd.f32 %v583, 1.0
    %v585 = vrcp.pop %v584
    %v586 = vmul.f32 1.0, %v585
    %587 = vst [vmem:[#allocation9] sm:$0x1] %v586
    // Predicated region
    $region34: #{tpu_custom_call.1} parent=1 // pred_check
      _
    $region35: #{tpu_custom_call.1} parent=1 // pred_check_branch
      %589 = sbr.rel (0) target = $region37
    $region36: #{tpu_custom_call.1} parent=1 // pred_region
      %s591 = ssub.s32 16, 16
      %592 = vsyncadd [#allocation4], %s591
      %s594 = sshll.u32 [#allocation9], 4
      %s595 = int_to_ptr.vmem [resolvable:$true] %s594
      %597 = dma.vmem_to_hbm [thread:$0]  %s595, 16, %s5, [#allocation4]
    $region37: #{tpu_custom_call.1} parent=1 // pred_fallthru
      _
    // Predicated region
    $region38: #{tpu_custom_call.1} parent=1 // pred_check
      _
    $region39: #{tpu_custom_call.1} parent=1 // pred_check_branch
      %599 = sbr.rel (0) target = $region41
    $region40: #{tpu_custom_call.1} parent=1 // pred_region
      %600 = dma.done [#allocation4], 16
    $region41: #{tpu_custom_call.1} parent=1 // pred_fallthru
      _
    %601 = vsyncpa [#allocation4], 1
    %602 = vsyncpa [#allocation5], 1
    %603 = vsyncpa [#allocation7], 1

</llo_original>
